<compile_context>
chip_gen: v7x
topology: tpu7x:2x2x1
jax: 0.10.0
libtpu: 0.0.40
codegen_flags: <defaults>
</compile_context>

<pallas_src>
import functools

import jax
import jax.numpy as jnp
from jax import lax
from jax.experimental import pallas as pl
from jax.experimental.pallas import tpu as pltpu


def _expand_norm_shuffle_kernel(x_ref, w_ref, avg_ref, g_ref, b_ref, o_ref, *,
                                eps, tile_bh, w_px, half_ch):
    # x_ref:   (tile_bh*W, C_in)            input tokens
    # w_ref:   (C_in, 4*c_out)              expand weight (already transposed)
    # avg_ref: (4*c_out, 4*c_out) bf16      block-diagonal per-group averaging matrix
    #                                       (entries 0 / 1/32, exact in bf16)
    # g_ref:   (1, 4*c_out)                 gamma tiled over the 4 (p1,p2) groups
    # b_ref:   (1, 4*c_out)                 beta  tiled over the 4 (p1,p2) groups
    # o_ref:   (tile_bh, 2, W, 2*c_out)     pixel-shuffled output block

    # Expand matmul (default precision — same rounding path as the XLA reference).
    y = jnp.dot(x_ref[...], w_ref[...], preferred_element_type=jnp.float32)

    avg = avg_ref[...]

    # Per-group LayerNorm stats on the MXU, broadcast back to full 128-lane width.
    # 2-pass bf16 hi/lo split: since the averaging weights are exact in bf16 the
    # result matches an exact f32 reduction to ~1e-6, at 1/3 the MXU passes of
    # Precision.HIGHEST.
    y_hi = y.astype(jnp.bfloat16)
    y_lo = (y - y_hi.astype(jnp.float32)).astype(jnp.bfloat16)
    mean = (jnp.dot(y_hi, avg, preferred_element_type=jnp.float32) +
            jnp.dot(y_lo, avg, preferred_element_type=jnp.float32))

    centered = y - mean
    sq = centered * centered
    sq_hi = sq.astype(jnp.bfloat16)
    sq_lo = (sq - sq_hi.astype(jnp.float32)).astype(jnp.bfloat16)
    var = (jnp.dot(sq_hi, avg, preferred_element_type=jnp.float32) +
           jnp.dot(sq_lo, avg, preferred_element_type=jnp.float32))

    # Single full-width normalize + affine (no per-group lane slicing).
    out = (centered * lax.rsqrt(var + eps) * g_ref[...] + b_ref[...]).astype(o_ref.dtype)

    # Pixel-shuffle writeback.  Channel layout is (p1, p2, c): the p1 halves go to
    # the two row-parities; (w, p2, c) flatten contiguously into the (W, 2*c_out)
    # trailing dims, so only a leading-dim reshape is needed (no transpose).
    o_ref[:, 0:1, :, :] = out[:, :half_ch].reshape(tile_bh, 1, w_px, half_ch)
    o_ref[:, 1:2, :, :] = out[:, half_ch:].reshape(tile_bh, 1, w_px, half_ch)


def _pick_tile_bh(n_bh, w_px, target_tokens):
    """Largest exact-divisor (b,h)-row tile with sublane-aligned tokens; no padding."""
    cap = max(1, min(n_bh, target_tokens // max(w_px, 1)))
    if n_bh >= 2:
        cap = min(cap, n_bh // 2)          # keep >=2 grid steps (megacore / v7x 2-TC)
    cap = max(cap, 1)
    for t in range(cap, 0, -1):
        if n_bh % t == 0 and (t * w_px) % 8 == 0:
            return t
    # No aligned divisor exists: fall back to one full-extent block
    # (block dim == full array dim is always a legal BlockSpec).
    return n_bh


def patch_expand_2d(x, w_expand, gamma, beta, *, dim_scale=2, eps=1e-5,
                    target_tokens=4096):
    """x: (B, H, W, C) with C = 2*dim.  Returns (B, 2H, 2W, C // dim_scale)."""
    assert dim_scale == 2, "kernel specialised to dim_scale=2 (as in PatchExpand2D)"
    B, H, W, C = x.shape
    c_out = C // dim_scale
    c_exp = dim_scale * C                        # expanded channels = 4 * c_out
    n_groups = dim_scale * dim_scale
    half_ch = dim_scale * c_out                  # lanes per p1 half (= p2 * c)

    n_bh = B * H
    tile_bh = _pick_tile_bh(n_bh, W, target_tokens)
    grid = (n_bh // tile_bh,)
    tile_tok = tile_bh * W

    x_flat = x.reshape(n_bh * W, C)

    # nn.Linear does x @ W^T.
    w_t = w_expand.T.astype(x.dtype)                                  # (C, c_exp)
    # Block-diagonal averaging matrix: (y @ avg)[t, l] = mean of l's c_out-ch group.
    # Entries are 0 or 1/c_out (= 2^-5 for c_out=32) -> exactly representable in bf16.
    gids = jnp.arange(c_exp) // c_out
    avg = ((gids[:, None] == gids[None, :]).astype(jnp.float32) / c_out
           ).astype(jnp.bfloat16)
    # gamma/beta tiled to full lane width (group order matches the (p1, p2, c) layout).
    g_t = jnp.tile(gamma, n_groups).reshape(1, c_exp).astype(jnp.float32)
    b_t = jnp.tile(beta, n_groups).reshape(1, c_exp).astype(jnp.float32)

    # Explicit VMEM budget derived from the actual per-step buffers
    # (double-buffered in/out blocks + f32 intermediates), clamped for v7x (64 MiB).
    itemsize = jnp.dtype(x.dtype).itemsize
    vmem_bytes = int(
        2 * tile_tok * C * itemsize          # double-buffered input block
        + 2 * tile_tok * c_exp * itemsize    # double-buffered output block
        + 8 * tile_tok * c_exp * 4           # f32/bf16 intermediates (y/mean/centered/var/hi/lo)
        + 2 * (C + c_exp + 2) * c_exp * 4    # weight / avg / gamma / beta blocks
        + (2 << 20))                         # headroom
    vmem_bytes = min(max(vmem_bytes, 32 << 20), 64 << 20)

    kernel = functools.partial(_expand_norm_shuffle_kernel, eps=eps,
                               tile_bh=tile_bh, w_px=W, half_ch=half_ch)

    out = pl.pallas_call(
        kernel,
        out_shape=jax.ShapeDtypeStruct((n_bh, dim_scale, W, half_ch), x.dtype),
        grid_spec=pltpu.PrefetchScalarGridSpec(
            num_scalar_prefetch=0,
            grid=grid,
            in_specs=[
                pl.BlockSpec((tile_tok, C), lambda i: (i, 0)),        # x tokens
                pl.BlockSpec((C, c_exp), lambda i: (0, 0)),           # expand weight
                pl.BlockSpec((c_exp, c_exp), lambda i: (0, 0)),       # averaging matrix
                pl.BlockSpec((1, c_exp), lambda i: (0, 0)),           # gamma (tiled)
                pl.BlockSpec((1, c_exp), lambda i: (0, 0)),           # beta  (tiled)
            ],
            out_specs=pl.BlockSpec((tile_bh, dim_scale, W, half_ch),
                                   lambda i: (i, 0, 0, 0)),
        ),
        compiler_params=pltpu.CompilerParams(
            dimension_semantics=("parallel",),
            vmem_limit_bytes=vmem_bytes),
    )(x_flat, w_t, avg, g_t, b_t)

    # (B*H, p1, W, p2*c) row-major is bit-identical to (B, 2H, 2W, c) row-major,
    # so this reshape is free (no extra HBM pass for the einops rearrange).
    return out.reshape(B, H * dim_scale, W * dim_scale, c_out)


def _reference(x, w_expand, gamma, beta, *, dim_scale=2, eps=1e-5):
    B, H, W, C = x.shape
    c_out = C // dim_scale
    y = jnp.einsum("bhwc,oc->bhwo", x, w_expand)
    y = y.reshape(B, H, W, dim_scale, dim_scale, c_out)
    y = jnp.transpose(y, (0, 1, 3, 2, 4, 5)).reshape(B, H * dim_scale, W * dim_scale, c_out)
    mean = jnp.mean(y, axis=-1, keepdims=True)
    var = jnp.mean((y - mean) ** 2, axis=-1, keepdims=True)
    return (y - mean) * lax.rsqrt(var + eps) * gamma + beta


if __name__ == "__main__":
    # Module construction: PatchExpand2D(dim=32) -> self.dim = C = 64,
    # expand: Linear(64, 128, bias=False), norm: LayerNorm(32).
    dim_param = 32
    dim_scale = 2
    C = 2 * dim_param                 # input channels
    c_exp = dim_scale * C             # 128
    c_out = C // dim_scale            # 32

    B, H, W = 2, 8, 8

    key = jax.random.PRNGKey(0)
    kx, kw, kg, kb = jax.random.split(key, 4)
    x = jax.random.normal(kx, (B, H, W, C), dtype=jnp.float32)
    w_expand = jax.random.normal(kw, (c_exp, C), dtype=jnp.float32) * 0.05  # (out, in)
    gamma = 1.0 + 0.1 * jax.random.normal(kg, (c_out,), dtype=jnp.float32)
    beta = 0.1 * jax.random.normal(kb, (c_out,), dtype=jnp.float32)

    # Default (production) tiling; for these small shapes the picker yields a
    # 2-step grid, still exercising the pipelined path.
    out = patch_expand_2d(x, w_expand, gamma, beta, dim_scale=dim_scale)
    out = jax.block_until_ready(out)

    ref = _reference(x, w_expand, gamma, beta, dim_scale=dim_scale)
    assert out.shape == (B, H * dim_scale, W * dim_scale, c_out), out.shape
    assert jnp.allclose(out, ref, atol=1e-4, rtol=1e-4), float(jnp.max(jnp.abs(out - ref)))

    print("KERNEL_OK")
</pallas_src>

<mosaic_0001>
module attributes {stable_mosaic.version = 11 : i64} {
  func.func @_expand_norm_shuffle_kernel(%arg0: i32, %arg1: memref<64x64xf32, #tpu.memory_space<vmem>>, %arg2: memref<64x128xf32, #tpu.memory_space<vmem>>, %arg3: memref<128x128xbf16, #tpu.memory_space<vmem>>, %arg4: memref<1x128xf32, #tpu.memory_space<vmem>>, %arg5: memref<1x128xf32, #tpu.memory_space<vmem>>, %arg6: memref<8x2x8x64xf32, #tpu.memory_space<vmem>>) attributes {dimension_semantics = [#tpu.dimension_semantics<parallel>], iteration_bounds = array<i64: 2>, scalar_prefetch = 0 : i64, scratch_operands = 0 : i64, tpu.core_type = #tpu.core_type<tc>, window_params = [{transform_indices = @transform_0, window_bounds = array<i64: 64, 64>}, {pipeline_mode = #tpu.pipeline_mode<synchronous>, transform_indices = @transform_1, window_bounds = array<i64: 64, 128>}, {pipeline_mode = #tpu.pipeline_mode<synchronous>, transform_indices = @transform_2, window_bounds = array<i64: 128, 128>}, {pipeline_mode = #tpu.pipeline_mode<synchronous>, transform_indices = @transform_3, window_bounds = array<i64: 1, 128>}, {pipeline_mode = #tpu.pipeline_mode<synchronous>, transform_indices = @transform_4, window_bounds = array<i64: 1, 128>}, {transform_indices = @transform_5, window_bounds = array<i64: 8, 2, 8, 64>}]} {
    %c0 = arith.constant 0 : index
    %c0_0 = arith.constant 0 : index
    %0 = vector.load %arg1[%c0, %c0_0] : memref<64x64xf32, #tpu.memory_space<vmem>>, vector<64x64xf32>
    %c0_1 = arith.constant 0 : index
    %c0_2 = arith.constant 0 : index
    %1 = vector.load %arg2[%c0_1, %c0_2] : memref<64x128xf32, #tpu.memory_space<vmem>>, vector<64x128xf32>
    %cst = arith.constant dense<0.000000e+00> : vector<64x128xf32>
    %2 = tpu.matmul %0, %1, %cst {dimension_numbers = #tpu.dot_dimension_numbers<[1], [0], [0], [1], [0, 0, 1, 1], [], []>} : vector<64x64xf32>, vector<64x128xf32>, vector<64x128xf32> -> vector<64x128xf32>
    %c0_3 = arith.constant 0 : index
    %c0_4 = arith.constant 0 : index
    %3 = vector.load %arg3[%c0_3, %c0_4] : memref<128x128xbf16, #tpu.memory_space<vmem>>, vector<128x128xbf16>
    %4 = arith.truncf %2 : vector<64x128xf32> to vector<64x128xbf16>
    %5 = arith.extf %4 : vector<64x128xbf16> to vector<64x128xf32>
    %6 = arith.subf %2, %5 : vector<64x128xf32>
    %7 = arith.truncf %6 : vector<64x128xf32> to vector<64x128xbf16>
    %cst_5 = arith.constant dense<0.000000e+00> : vector<64x128xf32>
    %8 = tpu.matmul %4, %3, %cst_5 {dimension_numbers = #tpu.dot_dimension_numbers<[1], [0], [0], [1], [0, 0, 1, 1], [], []>} : vector<64x128xbf16>, vector<128x128xbf16>, vector<64x128xf32> -> vector<64x128xf32>
    %cst_6 = arith.constant dense<0.000000e+00> : vector<64x128xf32>
    %9 = tpu.matmul %7, %3, %cst_6 {dimension_numbers = #tpu.dot_dimension_numbers<[1], [0], [0], [1], [0, 0, 1, 1], [], []>} : vector<64x128xbf16>, vector<128x128xbf16>, vector<64x128xf32> -> vector<64x128xf32>
    %10 = arith.addf %8, %9 : vector<64x128xf32>
    %11 = arith.subf %2, %10 : vector<64x128xf32>
    %12 = arith.mulf %11, %11 : vector<64x128xf32>
    %13 = arith.truncf %12 : vector<64x128xf32> to vector<64x128xbf16>
    %14 = arith.extf %13 : vector<64x128xbf16> to vector<64x128xf32>
    %15 = arith.subf %12, %14 : vector<64x128xf32>
    %16 = arith.truncf %15 : vector<64x128xf32> to vector<64x128xbf16>
    %cst_7 = arith.constant dense<0.000000e+00> : vector<64x128xf32>
    %17 = tpu.matmul %13, %3, %cst_7 {dimension_numbers = #tpu.dot_dimension_numbers<[1], [0], [0], [1], [0, 0, 1, 1], [], []>} : vector<64x128xbf16>, vector<128x128xbf16>, vector<64x128xf32> -> vector<64x128xf32>
    %cst_8 = arith.constant dense<0.000000e+00> : vector<64x128xf32>
    %18 = tpu.matmul %16, %3, %cst_8 {dimension_numbers = #tpu.dot_dimension_numbers<[1], [0], [0], [1], [0, 0, 1, 1], [], []>} : vector<64x128xbf16>, vector<128x128xbf16>, vector<64x128xf32> -> vector<64x128xf32>
    %19 = arith.addf %17, %18 : vector<64x128xf32>
    %cst_9 = arith.constant 9.99999974E-6 : f32
    %20 = vector.broadcast %cst_9 : f32 to vector<64x128xf32>
    %21 = arith.addf %19, %20 : vector<64x128xf32>
    %22 = math.rsqrt %21 : vector<64x128xf32>
    %23 = arith.mulf %11, %22 : vector<64x128xf32>
    %c0_10 = arith.constant 0 : index
    %c0_11 = arith.constant 0 : index
    %24 = vector.load %arg4[%c0_10, %c0_11] : memref<1x128xf32, #tpu.memory_space<vmem>>, vector<1x128xf32>
    %25 = vector.broadcast %24 : vector<1x128xf32> to vector<64x128xf32>
    %26 = arith.mulf %23, %25 : vector<64x128xf32>
    %c0_12 = arith.constant 0 : index
    %c0_13 = arith.constant 0 : index
    %27 = vector.load %arg5[%c0_12, %c0_13] : memref<1x128xf32, #tpu.memory_space<vmem>>, vector<1x128xf32>
    %28 = vector.broadcast %27 : vector<1x128xf32> to vector<64x128xf32>
    %29 = arith.addf %26, %28 : vector<64x128xf32>
    %30 = vector.extract_strided_slice %29 {offsets = [0, 0], sizes = [64, 64], strides = [1, 1]} : vector<64x128xf32> to vector<64x64xf32>
    %31 = vector.shape_cast %30 : vector<64x64xf32> to vector<8x1x8x64xf32>
    %c0_14 = arith.constant 0 : index
    %c0_15 = arith.constant 0 : index
    %c0_16 = arith.constant 0 : index
    %c0_17 = arith.constant 0 : index
    %32 = vector.load %arg6[%c0_14, %c0_15, %c0_16, %c0_17] : memref<8x2x8x64xf32, #tpu.memory_space<vmem>>, vector<8x1x8x64xf32>
    tpu.vector_store %arg6[%c0_14, %c0_15, %c0_16, %c0_17], %31 {strides = array<i32>} : memref<8x2x8x64xf32, #tpu.memory_space<vmem>>, vector<8x1x8x64xf32>,
    %33 = vector.extract_strided_slice %29 {offsets = [0, 64], sizes = [64, 64], strides = [1, 1]} : vector<64x128xf32> to vector<64x64xf32>
    %34 = vector.shape_cast %33 : vector<64x64xf32> to vector<8x1x8x64xf32>
    %c0_18 = arith.constant 0 : index
    %c1 = arith.constant 1 : index
    %c0_19 = arith.constant 0 : index
    %c0_20 = arith.constant 0 : index
    %35 = vector.load %arg6[%c0_18, %c1, %c0_19, %c0_20] : memref<8x2x8x64xf32, #tpu.memory_space<vmem>>, vector<8x1x8x64xf32>
    tpu.vector_store %arg6[%c0_18, %c1, %c0_19, %c0_20], %34 {strides = array<i32>} : memref<8x2x8x64xf32, #tpu.memory_space<vmem>>, vector<8x1x8x64xf32>,
    return
  }
  func.func @transform_0(%arg0: i32) -> (i32, i32) {
    %c0_i32 = arith.constant 0 : i32
    %c0_i32_0 = arith.constant 0 : i32
    return %arg0, %c0_i32 : i32, i32
  }
  func.func @transform_1(%arg0: i32) -> (i32, i32) {
    %c0_i32 = arith.constant 0 : i32
    %c0_i32_0 = arith.constant 0 : i32
    %c0_i32_1 = arith.constant 0 : i32
    return %c0_i32, %c0_i32_0 : i32, i32
  }
  func.func @transform_2(%arg0: i32) -> (i32, i32) {
    %c0_i32 = arith.constant 0 : i32
    %c0_i32_0 = arith.constant 0 : i32
    %c0_i32_1 = arith.constant 0 : i32
    return %c0_i32, %c0_i32_0 : i32, i32
  }
  func.func @transform_3(%arg0: i32) -> (i32, i32) {
    %c0_i32 = arith.constant 0 : i32
    %c0_i32_0 = arith.constant 0 : i32
    %c0_i32_1 = arith.constant 0 : i32
    return %c0_i32, %c0_i32_0 : i32, i32
  }
  func.func @transform_4(%arg0: i32) -> (i32, i32) {
    %c0_i32 = arith.constant 0 : i32
    %c0_i32_0 = arith.constant 0 : i32
    %c0_i32_1 = arith.constant 0 : i32
    return %c0_i32, %c0_i32_0 : i32, i32
  }
  func.func @transform_5(%arg0: i32) -> (i32, i32, i32, i32) {
    %c0_i32 = arith.constant 0 : i32
    %c0_i32_0 = arith.constant 0 : i32
    %c0_i32_1 = arith.constant 0 : i32
    %c0_i32_2 = arith.constant 0 : i32
    return %arg0, %c0_i32, %c0_i32_0, %c0_i32_1 : i32, i32, i32, i32
  }
}

</mosaic_0001>

<llo_original>
// kernel: tpu_custom_call.1
$region0: #{tpu_custom_call.1}
  #allocation0 [shape = 'u32[]', space=smem, size = 0x4, offset = 0x4, fixed_abs, tag = 'smem constant byte address 0x4 - core index']
  #allocation1 [shape = 'u32[144,128]{1,0:T(1,128)}', space=vmem, size = 0x12000, scoped, tag = 'internal scratch']
  %s0 = inlined_call_operand.vmem [shape: f32[128,64], index: 0, kind: input, shape index: {}]
  %s1 = inlined_call_operand.vmem [shape: f32[64,128], index: 1, kind: input, shape index: {}]
  %s2 = inlined_call_operand.vmem [shape: bf16[128,128], index: 2, kind: input, shape index: {}]
  %s3 = inlined_call_operand.vmem [shape: f32[1,128], index: 3, kind: input, shape index: {}]
  %s4 = inlined_call_operand.vmem [shape: f32[1,128], index: 4, kind: input, shape index: {}]
  %s5 = inlined_call_operand.hbm [shape: f32[16,2,8,64], index: 5, kind: output, shape index: {}]
  %s6 = sld [smem:[#allocation0]]
  $region53: #{tpu_custom_call.1} parent=0
    _
  %s8 = ssub.s32 1, %s6
  %s9 = scalar_select 0, %s8, %s6
  $region1: #{tpu_custom_call.1} parent=0
    #allocation2 [shape = 'u8[131072]{0}', space=vmem, size = 0x20000, scoped, tag = 'output window, operand 0']
    #allocation3 [shape = 's32[2]{0}', space=sflag, size = 0x8, scoped, tag = 'scoped memory for tpu_custom_call.1']
    %10 = vsyncpa [#allocation3], 0
    %s11 = scalar_lea.sflag [#allocation3], 1
    %12 = vsyncpa %s11, 0
    loop: start=0, step=1, limit=4
    $region2: #{tpu_custom_call.1} parent=1 // loop_pre_header
      _
    $region3: #{tpu_custom_call.1} parent=1 // loop_header
      %s14 = sphi 0, %s18
      %p15 = scmp.ge.s32.totalorder %s14, 4
      %s24 = sphi 0, %s26
      %s27 = sphi 0, %s24
      %s28 = sphi 0, %s27
      %s44 = sphi 0, %s28
      %s48 = sphi 0, %s48
      %s50 = sphi 0, %s48
      %s51 = sphi 0, %s50
      %s65 = sphi 0, %s51
      %s69 = sphi 0, %s69
      %s71 = sphi 0, %s69
      %s72 = sphi 0, %s71
      %s86 = sphi 0, %s72
      %s90 = sphi 0, %s90
      %s92 = sphi 0, %s90
      %s93 = sphi 0, %s92
      %s107 = sphi 0, %s93
      %s111 = sphi 0, %s111
      %s113 = sphi 0, %s111
      %s114 = sphi 0, %s113
      %s128 = sphi 0, %s114
      %s134 = sphi 0, %s136
      %s137 = sphi 0, %s134
      %s138 = sphi 0, %s137
      %s154 = sphi 0, %s138
    $region4: #{tpu_custom_call.1} parent=1 // loop_header_branch
      %17 = sbr.rel (%p15) target = $region8
    $region5: #{tpu_custom_call.1} parent=1 // loop_body
      %s19 = ssub.s32 %s14, 1
      %s20 = ssub.s32 %s14, 2
      %s21 = sadd.s32 %s14, 1
      %s22 = ssub.s32 %s14, %s21
      %p23 = scmp.eq.s32.totalorder %s22, 0
      %s25 = sadd.s32 %s24, 1
      %s26 = scalar_select %p23, %s24, %s25
      %p29 = pneg %p23
      %p30 = scmp.eq.s32.totalorder %s14, 1
      %p31 = por %p29, %p30
      %p32 = scmp.ne.s32.totalorder %s24, %s27
      %p33 = scmp.eq.s32.totalorder %s14, 0
      %p34 = por %p32, %p33
      %p35 = scmp.ne.s32.totalorder %s24, %s27
      %p36 = scmp.eq.s32.totalorder %s19, 1
      %p37 = por %p35, %p36
      %p38 = scmp.ne.s32.totalorder %s27, %s28
      %p39 = scmp.eq.s32.totalorder %s19, 0
      %p40 = por %p38, %p39
      %p41 = scmp.ne.s32.totalorder %s27, %s28
      %p42 = scmp.eq.s32.totalorder %s20, 1
      %p43 = por %p41, %p42
      %p45 = scmp.ne.s32.totalorder %s28, %s44
      %p46 = scmp.eq.s32.totalorder %s20, 0
      %p47 = por %p45, %p46
      %s49 = sadd.s32 %s48, 1
      %p52 = scmp.eq.s32.totalorder %s14, 1
      %p53 = scmp.ne.s32.totalorder %s48, %s50
      %p54 = scmp.eq.s32.totalorder %s14, 0
      %p55 = por %p53, %p54
      %p56 = scmp.ne.s32.totalorder %s48, %s50
      %p57 = scmp.eq.s32.totalorder %s19, 1
      %p58 = por %p56, %p57
      %p59 = scmp.ne.s32.totalorder %s50, %s51
      %p60 = scmp.eq.s32.totalorder %s19, 0
      %p61 = por %p59, %p60
      %p62 = scmp.ne.s32.totalorder %s50, %s51
      %p63 = scmp.eq.s32.totalorder %s20, 1
      %p64 = por %p62, %p63
      %p66 = scmp.ne.s32.totalorder %s51, %s65
      %p67 = scmp.eq.s32.totalorder %s20, 0
      %p68 = por %p66, %p67
      %s70 = sadd.s32 %s69, 1
      %p73 = scmp.eq.s32.totalorder %s14, 1
      %p74 = scmp.ne.s32.totalorder %s69, %s71
      %p75 = scmp.eq.s32.totalorder %s14, 0
      %p76 = por %p74, %p75
      %p77 = scmp.ne.s32.totalorder %s69, %s71
      %p78 = scmp.eq.s32.totalorder %s19, 1
      %p79 = por %p77, %p78
      %p80 = scmp.ne.s32.totalorder %s71, %s72
      %p81 = scmp.eq.s32.totalorder %s19, 0
      %p82 = por %p80, %p81
      %p83 = scmp.ne.s32.totalorder %s71, %s72
      %p84 = scmp.eq.s32.totalorder %s20, 1
      %p85 = por %p83, %p84
      %p87 = scmp.ne.s32.totalorder %s72, %s86
      %p88 = scmp.eq.s32.totalorder %s20, 0
      %p89 = por %p87, %p88
      %s91 = sadd.s32 %s90, 1
      %p94 = scmp.eq.s32.totalorder %s14, 1
      %p95 = scmp.ne.s32.totalorder %s90, %s92
      %p96 = scmp.eq.s32.totalorder %s14, 0
      %p97 = por %p95, %p96
      %p98 = scmp.ne.s32.totalorder %s90, %s92
      %p99 = scmp.eq.s32.totalorder %s19, 1
      %p100 = por %p98, %p99
      %p101 = scmp.ne.s32.totalorder %s92, %s93
      %p102 = scmp.eq.s32.totalorder %s19, 0
      %p103 = por %p101, %p102
      %p104 = scmp.ne.s32.totalorder %s92, %s93
      %p105 = scmp.eq.s32.totalorder %s20, 1
      %p106 = por %p104, %p105
      %p108 = scmp.ne.s32.totalorder %s93, %s107
      %p109 = scmp.eq.s32.totalorder %s20, 0
      %p110 = por %p108, %p109
      %s112 = sadd.s32 %s111, 1
      %p115 = scmp.eq.s32.totalorder %s14, 1
      %p116 = scmp.ne.s32.totalorder %s111, %s113
      %p117 = scmp.eq.s32.totalorder %s14, 0
      %p118 = por %p116, %p117
      %p119 = scmp.ne.s32.totalorder %s111, %s113
      %p120 = scmp.eq.s32.totalorder %s19, 1
      %p121 = por %p119, %p120
      %p122 = scmp.ne.s32.totalorder %s113, %s114
      %p123 = scmp.eq.s32.totalorder %s19, 0
      %p124 = por %p122, %p123
      %p125 = scmp.ne.s32.totalorder %s113, %s114
      %p126 = scmp.eq.s32.totalorder %s20, 1
      %p127 = por %p125, %p126
      %p129 = scmp.ne.s32.totalorder %s114, %s128
      %p130 = scmp.eq.s32.totalorder %s20, 0
      %p131 = por %p129, %p130
      %s132 = ssub.s32 %s14, %s21
      %p133 = scmp.eq.s32.totalorder %s132, 0
      %s135 = sadd.s32 %s134, 1
      %s136 = scalar_select %p133, %s134, %s135
      %p139 = pneg %p133
      %p140 = scmp.eq.s32.totalorder %s14, 1
      %p141 = por %p139, %p140
      %p142 = scmp.ne.s32.totalorder %s134, %s137
      %p143 = scmp.eq.s32.totalorder %s14, 0
      %p144 = por %p142, %p143
      %p145 = scmp.ne.s32.totalorder %s134, %s137
      %p146 = scmp.eq.s32.totalorder %s19, 1
      %p147 = por %p145, %p146
      %p148 = scmp.ne.s32.totalorder %s137, %s138
      %p149 = scmp.eq.s32.totalorder %s19, 0
      %p150 = por %p148, %p149
      %p151 = scmp.ne.s32.totalorder %s137, %s138
      %p152 = scmp.eq.s32.totalorder %s20, 1
      %p153 = por %p151, %p152
      %p155 = scmp.ne.s32.totalorder %s138, %s154
      %p156 = scmp.eq.s32.totalorder %s20, 0
      %p157 = por %p155, %p156
      %p158 = scmp.le.s32.totalorder 1, %s14
      %p159 = scmp.lt.s32.totalorder %s14, 3
      %p160 = pnand %p158, %p159
      %p161 = pneg %p160
      // Predicated region
      $region9: #{tpu_custom_call.1} parent=5 // pred_check
        _
      $region10: #{tpu_custom_call.1} parent=5 // pred_check_branch
        %163 = sbr.rel (%p160) target = $region12
      $region11: #{tpu_custom_call.1} parent=5 // pred_region
        %s164 = ssub.s32 %s14, 1
        // Predicated region
        $region13: #{tpu_custom_call.1} parent=11 // pred_check
          %p165 = pneg %p61
        $region14: #{tpu_custom_call.1} parent=11 // pred_check_branch
          %167 = sbr.rel (%p165) target = $region16
        $region15: #{tpu_custom_call.1} parent=11 // pred_region
          _
        $region16: #{tpu_custom_call.1} parent=11 // pred_fallthru
          _
        // Predicated region
        $region17: #{tpu_custom_call.1} parent=11 // pred_check
          %p168 = pneg %p82
        $region18: #{tpu_custom_call.1} parent=11 // pred_check_branch
          %170 = sbr.rel (%p168) target = $region20
        $region19: #{tpu_custom_call.1} parent=11 // pred_region
          _
        $region20: #{tpu_custom_call.1} parent=11 // pred_fallthru
          _
        // Predicated region
        $region21: #{tpu_custom_call.1} parent=11 // pred_check
          %p171 = pneg %p103
        $region22: #{tpu_custom_call.1} parent=11 // pred_check_branch
          %173 = sbr.rel (%p171) target = $region24
        $region23: #{tpu_custom_call.1} parent=11 // pred_region
          _
        $region24: #{tpu_custom_call.1} parent=11 // pred_fallthru
          _
        // Predicated region
        $region25: #{tpu_custom_call.1} parent=11 // pred_check
          %p174 = pneg %p124
        $region26: #{tpu_custom_call.1} parent=11 // pred_check_branch
          %176 = sbr.rel (%p174) target = $region28
        $region27: #{tpu_custom_call.1} parent=11 // pred_region
          _
        $region28: #{tpu_custom_call.1} parent=11 // pred_fallthru
          _
      $region12: #{tpu_custom_call.1} parent=5 // pred_fallthru
        _
      %p177 = scmp.lt.s32.totalorder %s14, 2
      // Predicated region
      $region29: #{tpu_custom_call.1} parent=5 // pred_check
        %p178 = pneg %p177
      $region30: #{tpu_custom_call.1} parent=5 // pred_check_branch
        %180 = sbr.rel (%p178) target = $region32
      $region31: #{tpu_custom_call.1} parent=5 // pred_region
        // Predicated region
        $region33: #{tpu_custom_call.1} parent=31 // pred_check
          %p181 = pneg %p34
        $region34: #{tpu_custom_call.1} parent=31 // pred_check_branch
          %183 = sbr.rel (%p181) target = $region36
        $region35: #{tpu_custom_call.1} parent=31 // pred_region
          %s184 = smul.u32 8, %s14
          %p185 = scmp.lt.s32.totalorder %s184, 15
          %s186 = scalar_select %p185, %s184, 15
          %s187 = smul.addr %s186, 8
          %s188 = scalar_lea.vmem %s0, %s187
          %s189 = smul.u32 8, %s14
        $region36: #{tpu_custom_call.1} parent=31 // pred_fallthru
          _
      $region32: #{tpu_custom_call.1} parent=5 // pred_fallthru
        _
      %p190 = scmp.le.s32.totalorder 1, %s14
      %p191 = scmp.lt.s32.totalorder %s14, 3
      %p192 = pnand %p190, %p191
      %p193 = pneg %p192
      // Predicated region
      $region37: #{tpu_custom_call.1} parent=5 // pred_check
        _
      $region38: #{tpu_custom_call.1} parent=5 // pred_check_branch
        %195 = sbr.rel (%p192) target = $region40
      $region39: #{tpu_custom_call.1} parent=5 // pred_region
        %s196 = ssub.s32 %s14, 1
        %s197 = smul.u32 8, %s19
        %p198 = scmp.lt.s32.totalorder %s197, 15
        %s199 = scalar_select %p198, %s197, 15
        %s200 = smul.addr %s199, 8
        %s201 = scalar_lea.vmem %s0, %s200
        %p202 = pneg %p40
        %p203 = pneg %p37
        %p204 = pneg %p61
        %p205 = pneg %p58
        %p206 = pneg %p82
        %p207 = pneg %p79
        %p208 = pneg %p103
        %p209 = pneg %p100
        %p210 = pneg %p124
        %p211 = pneg %p121
        %p212 = pneg %p150
        %p213 = pneg %p147
        %s214 = sand.u32 %s137, 1
        %s215 = scalar_lea.sflag [#allocation3], %s214
        %s216 = sand.u32 %s137, 1
        %s217 = smul.addr %s216, 128
        %s218 = scalar_lea.vmem [#allocation2], %s217
        %s219 = smul.u32 8, %s19
        %p220 = scmp.lt.s32.totalorder %s219, 15
        %s221 = scalar_select %p220, %s219, 15
        %s222 = smul.addr %s221, 8
        %s223 = scalar_lea.vmem %s0, %s222
        %s224 = smul.u32 8, %s19
        %s225 = smul.u32 8, %s19
        %v227 = vld [vmem:[%s223] sm:$0xff]
        %v228 = vld [vmem:[%s223 + $0x8] sm:$0xff]
        %v229 = vld [vmem:[%s223 + $0x10] sm:$0xff]
        %v230 = vld [vmem:[%s223 + $0x18] sm:$0xff]
        %v231 = vld [vmem:[%s223 + $0x20] sm:$0xff]
        %v232 = vld [vmem:[%s223 + $0x28] sm:$0xff]
        %v233 = vld [vmem:[%s223 + $0x30] sm:$0xff]
        %v234 = vld [vmem:[%s223 + $0x38] sm:$0xff]
        %v235 = vld [vmem:[%s1] sm:$0xff]
        %v236 = vld [vmem:[%s1 + $0x8] sm:$0xff]
        %v237 = vld [vmem:[%s1 + $0x10] sm:$0xff]
        %v238 = vld [vmem:[%s1 + $0x18] sm:$0xff]
        %v239 = vld [vmem:[%s1 + $0x20] sm:$0xff]
        %v240 = vld [vmem:[%s1 + $0x28] sm:$0xff]
        %v241 = vld [vmem:[%s1 + $0x30] sm:$0xff]
        %v242 = vld [vmem:[%s1 + $0x38] sm:$0xff]
        %vm243 = vcmask 523264
        %v245 = vsel %vm243, %v227, 0
        %v248 = vsel %vm243, %v228, 0
        %v251 = vsel %vm243, %v229, 0
        %v254 = vsel %vm243, %v230, 0
        %v257 = vsel %vm243, %v231, 0
        %v260 = vsel %vm243, %v232, 0
        %v263 = vsel %vm243, %v233, 0
        %v266 = vsel %vm243, %v234, 0
        %268 = vmatprep.subr.mxu0 0.0
        %269 = vmatpush1.msra.mxu0 %v235
        %270 = vmatprep.subr.mxu0 0.0
        %271 = vmatpush1.msra.mxu0 %v236
        %272 = vmatprep.subr.mxu0 0.0
        %273 = vmatpush1.msra.mxu0 %v237
        %274 = vmatprep.subr.mxu0 0.0
        %275 = vmatpush1.msra.mxu0 %v238
        %276 = vmatprep.subr.mxu0 0.0
        %277 = vmatpush1.msra.mxu0 %v239
        %278 = vmatprep.subr.mxu0 0.0
        %279 = vmatpush1.msra.mxu0 %v240
        %280 = vmatprep.subr.mxu0 0.0
        %281 = vmatpush1.msra.mxu0 %v241
        %282 = vmatprep.subr.mxu0 0.0
        %283 = vmatpush1.msra.mxu0 %v242
        %284 = vmatprep.subr.mxu0 0.0
        %285 = vmatpush1.msra.mxu0 0.0
        %286 = vmatprep.subr.mxu0 0.0
        %287 = vmatpush1.msra.mxu0 0.0
        %288 = vmatprep.subr.mxu0 0.0
        %289 = vmatpush1.msra.mxu0 0.0
        %290 = vmatprep.subr.mxu0 0.0
        %291 = vmatpush1.msra.mxu0 0.0
        %292 = vmatprep.subr.mxu0 0.0
        %293 = vmatpush1.msra.mxu0 0.0
        %294 = vmatprep.subr.mxu0 0.0
        %295 = vmatpush1.msra.mxu0 0.0
        %296 = vmatprep.subr.mxu0 0.0
        %297 = vmatpush1.msra.mxu0 0.0
        %298 = vmatprep.subr.mxu0 0.0
        %299 = vmatpush1.msra.mxu0 0.0
        %300 = vmatprep.subr.mxu0 0.0
        %301 = vmatpush1.msra.mxu0 0.0
        %302 = vmatprep.subr.mxu0 0.0
        %303 = vmatpush1.msra.mxu0 0.0
        %304 = vmatprep.subr.mxu0 0.0
        %305 = vmatpush1.msra.mxu0 0.0
        %306 = vmatprep.subr.mxu0 0.0
        %307 = vmatpush1.msra.mxu0 0.0
        %308 = vmatprep.subr.mxu0 0.0
        %309 = vmatpush1.msra.mxu0 0.0
        %310 = vmatprep.subr.mxu0 0.0
        %311 = vmatpush1.msra.mxu0 0.0
        %312 = vmatprep.subr.mxu0 0.0
        %313 = vmatpush1.msra.mxu0 0.0
        %314 = vmatprep.subr.mxu0 0.0
        %315 = vmatpush1.msra.mxu0 0.0
        %316 = vmatprep.subr.mxu0 0.0
        %317 = vmatpush1.msra.mxu0 0.0
        %318 = vmatprep.subr.mxu0 0.0
        %319 = vmatpush1.msra.mxu0 0.0
        %320 = vmatprep.subr.mxu0 0.0
        %321 = vmatpush1.msra.mxu0 0.0
        %322 = vmatprep.subr.mxu0 0.0
        %323 = vmatpush1.msra.mxu0 0.0
        %324 = vmatprep.subr.mxu0 0.0
        %325 = vmatpush1.msra.mxu0 0.0
        %326 = vmatprep.subr.mxu0 0.0
        %327 = vmatpush1.msra.mxu0 0.0
        %328 = vmatprep.subr.mxu0 0.0
        %329 = vmatpush1.msra.mxu0 0.0
        %330 = vmatprep.subr.mxu0 0.0
        %331 = vmatpush1.msra.mxu0 0.0
        %332 = vmatprep.mubr.f32.mxu0 0.0
        %333 = vmatmul.mubr.f32.gmra.mrb[0].mxu0 %v245
        %v334 = vpop.f32.mrb[0].mxu0
        %v335 = vadd.f32 0.0, %v334
        %v336 = vpop.f32.mrb[0].mxu0
        %337 = vmatprep.mubr.f32.mxu0 0.0
        %338 = vmatmul.mubr.f32.gmra.mrb[0].mxu0 %v248
        %v339 = vpop.f32.mrb[0].mxu0
        %v340 = vadd.f32 0.0, %v339
        %v341 = vpop.f32.mrb[0].mxu0
        %342 = vmatprep.mubr.f32.mxu0 0.0
        %343 = vmatmul.mubr.f32.gmra.mrb[0].mxu0 %v251
        %v344 = vpop.f32.mrb[0].mxu0
        %v345 = vadd.f32 0.0, %v344
        %v346 = vpop.f32.mrb[0].mxu0
        %347 = vmatprep.mubr.f32.mxu0 0.0
        %348 = vmatmul.mubr.f32.gmra.mrb[0].mxu0 %v254
        %v349 = vpop.f32.mrb[0].mxu0
        %v350 = vadd.f32 0.0, %v349
        %v351 = vpop.f32.mrb[0].mxu0
        %352 = vmatprep.mubr.f32.mxu0 0.0
        %353 = vmatmul.mubr.f32.gmra.mrb[0].mxu0 %v257
        %v354 = vpop.f32.mrb[0].mxu0
        %v355 = vadd.f32 0.0, %v354
        %v356 = vpop.f32.mrb[0].mxu0
        %357 = vmatprep.mubr.f32.mxu0 0.0
        %358 = vmatmul.mubr.f32.gmra.mrb[0].mxu0 %v260
        %v359 = vpop.f32.mrb[0].mxu0
        %v360 = vadd.f32 0.0, %v359
        %v361 = vpop.f32.mrb[0].mxu0
        %362 = vmatprep.mubr.f32.mxu0 0.0
        %363 = vmatmul.mubr.f32.gmra.mrb[0].mxu0 %v263
        %v364 = vpop.f32.mrb[0].mxu0
        %v365 = vadd.f32 0.0, %v364
        %v366 = vpop.f32.mrb[0].mxu0
        %367 = vmatprep.mubr.f32.mxu0 0.0
        %368 = vmatmul.mubr.f32.gmra.mrb[0].mxu0 %v266
        %v369 = vpop.f32.mrb[0].mxu0
        %v370 = vadd.f32 0.0, %v369
        %v371 = vpop.f32.mrb[0].mxu0
        %372 = vdwg.mxu0
        %v373 = vld [vmem:[%s2] sm:$0xf]
        %v374 = vld [vmem:[%s2 + $0x4] sm:$0xf]
        %v375 = vld [vmem:[%s2 + $0x8] sm:$0xf]
        %v376 = vld [vmem:[%s2 + $0xc] sm:$0xf]
        %v377 = vld [vmem:[%s2 + $0x10] sm:$0xf]
        %v378 = vld [vmem:[%s2 + $0x14] sm:$0xf]
        %v379 = vld [vmem:[%s2 + $0x18] sm:$0xf]
        %v380 = vld [vmem:[%s2 + $0x1c] sm:$0xf]
        %v381 = vld [vmem:[%s2 + $0x20] sm:$0xf]
        %v382 = vld [vmem:[%s2 + $0x24] sm:$0xf]
        %v383 = vld [vmem:[%s2 + $0x28] sm:$0xf]
        %v384 = vld [vmem:[%s2 + $0x2c] sm:$0xf]
        %v385 = vld [vmem:[%s2 + $0x30] sm:$0xf]
        %v386 = vld [vmem:[%s2 + $0x34] sm:$0xf]
        %v387 = vld [vmem:[%s2 + $0x38] sm:$0xf]
        %v388 = vld [vmem:[%s2 + $0x3c] sm:$0xf]
        %v389 = vpack.c.bf16 %v340, %v335
        %v390 = vpack.c.bf16 %v350, %v345
        %v391 = vpack.c.bf16 %v360, %v355
        %v392 = vpack.c.bf16 %v370, %v365
        %v393 = vunpack.c.l.bf16 %v389
        %v394 = vunpack.c.h.bf16 %v389
        %v395 = vunpack.c.l.bf16 %v390
        %v396 = vunpack.c.h.bf16 %v390
        %v397 = vunpack.c.l.bf16 %v391
        %v398 = vunpack.c.h.bf16 %v391
        %v399 = vunpack.c.l.bf16 %v392
        %v400 = vunpack.c.h.bf16 %v392
        %v401 = vsub.f32 %v335, %v393
        %v402 = vsub.f32 %v340, %v394
        %v403 = vsub.f32 %v345, %v395
        %v404 = vsub.f32 %v350, %v396
        %v405 = vsub.f32 %v355, %v397
        %v406 = vsub.f32 %v360, %v398
        %v407 = vsub.f32 %v365, %v399
        %v408 = vsub.f32 %v370, %v400
        %v409 = vpack.c.bf16 %v402, %v401
        %v410 = vpack.c.bf16 %v404, %v403
        %v411 = vpack.c.bf16 %v406, %v405
        %v412 = vpack.c.bf16 %v408, %v407
        %v429 = vunpack.c.l.b16 %v373
        %v430 = vunpack.c.l.b16 %v374
        %v431 = vunpack.c.l.b16 %v375
        %v432 = vunpack.c.l.b16 %v376
        %v433 = vunpack.c.l.b16 %v377
        %v434 = vunpack.c.l.b16 %v378
        %v435 = vunpack.c.l.b16 %v379
        %v436 = vunpack.c.l.b16 %v380
        %v437 = vunpack.c.l.b16 %v381
        %v438 = vunpack.c.l.b16 %v382
        %v439 = vunpack.c.l.b16 %v383
        %v440 = vunpack.c.l.b16 %v384
        %v441 = vunpack.c.l.b16 %v385
        %v442 = vunpack.c.l.b16 %v386
        %v443 = vunpack.c.l.b16 %v387
        %v444 = vunpack.c.l.b16 %v388
        %v445 = vpack.c.b16 %v430, %v429
        %v446 = vpack.c.b16 %v432, %v431
        %v447 = vpack.c.b16 %v434, %v433
        %v448 = vpack.c.b16 %v436, %v435
        %v449 = vpack.c.b16 %v438, %v437
        %v450 = vpack.c.b16 %v440, %v439
        %v451 = vpack.c.b16 %v442, %v441
        %v452 = vpack.c.b16 %v444, %v443
        %461 = vmatprep.subr.bf16.mxu0 0
        %462 = vmatpush1.bf16.msra.mxu0 %v445
        %463 = vmatprep.subr.bf16.mxu0 0
        %464 = vmatpush1.bf16.msra.mxu0 %v446
        %465 = vmatprep.subr.bf16.mxu0 0
        %466 = vmatpush1.bf16.msra.mxu0 %v447
        %467 = vmatprep.subr.bf16.mxu0 0
        %468 = vmatpush1.bf16.msra.mxu0 %v448
        %469 = vmatprep.subr.bf16.mxu0 0
        %470 = vmatpush1.bf16.msra.mxu0 %v449
        %471 = vmatprep.subr.bf16.mxu0 0
        %472 = vmatpush1.bf16.msra.mxu0 %v450
        %473 = vmatprep.subr.bf16.mxu0 0
        %474 = vmatpush1.bf16.msra.mxu0 %v451
        %475 = vmatprep.subr.bf16.mxu0 0
        %476 = vmatpush1.bf16.msra.mxu0 %v452
        %477 = vmatprep.subr.bf16.mxu0 0
        %478 = vmatpush1.bf16.msra.mxu0 0
        %479 = vmatprep.subr.bf16.mxu0 0
        %480 = vmatpush1.bf16.msra.mxu0 0
        %481 = vmatprep.subr.bf16.mxu0 0
        %482 = vmatpush1.bf16.msra.mxu0 0
        %483 = vmatprep.subr.bf16.mxu0 0
        %484 = vmatpush1.bf16.msra.mxu0 0
        %485 = vmatprep.subr.bf16.mxu0 0
        %486 = vmatpush1.bf16.msra.mxu0 0
        %487 = vmatprep.subr.bf16.mxu0 0
        %488 = vmatpush1.bf16.msra.mxu0 0
        %489 = vmatprep.subr.bf16.mxu0 0
        %490 = vmatpush1.bf16.msra.mxu0 0
        %491 = vmatprep.subr.bf16.mxu0 0
        %492 = vmatpush1.bf16.msra.mxu0 0
        %493 = vmatprep.mubr.bf16.mxu0 0
        %494 = vmatmul.mubr.bf16.gmra.mrb[0].mxu0 %v409
        %v495 = vpop.f32.mrb[0].mxu0
        %v496 = vadd.f32 0.0, %v495
        %v497 = vpop.f32.mrb[0].mxu0
        %v498 = vpop.f32.mrb[0].mxu0
        %v499 = vadd.f32 0.0, %v498
        %v500 = vpop.f32.mrb[0].mxu0
        %501 = vmatprep.mubr.bf16.mxu0 0
        %502 = vmatmul.mubr.bf16.gmra.mrb[0].mxu0 %v410
        %v503 = vpop.f32.mrb[0].mxu0
        %v504 = vadd.f32 0.0, %v503
        %v505 = vpop.f32.mrb[0].mxu0
        %v506 = vpop.f32.mrb[0].mxu0
        %v507 = vadd.f32 0.0, %v506
        %v508 = vpop.f32.mrb[0].mxu0
        %509 = vmatprep.mubr.bf16.mxu0 0
        %510 = vmatmul.mubr.bf16.gmra.mrb[0].mxu0 %v411
        %v511 = vpop.f32.mrb[0].mxu0
        %v512 = vadd.f32 0.0, %v511
        %v513 = vpop.f32.mrb[0].mxu0
        %v514 = vpop.f32.mrb[0].mxu0
        %v515 = vadd.f32 0.0, %v514
        %v516 = vpop.f32.mrb[0].mxu0
        %517 = vmatprep.mubr.bf16.mxu0 0
        %518 = vmatmul.mubr.bf16.gmra.mrb[0].mxu0 %v412
        %v519 = vpop.f32.mrb[0].mxu0
        %v520 = vadd.f32 0.0, %v519
        %v521 = vpop.f32.mrb[0].mxu0
        %v522 = vpop.f32.mrb[0].mxu0
        %v523 = vadd.f32 0.0, %v522
        %v524 = vpop.f32.mrb[0].mxu0
        %525 = vdwg.mxu0
        %526 = vmatprep.subr.bf16.mxu0 0
        %527 = vmatpush1.bf16.msra.mxu0 %v445
        %528 = vmatprep.subr.bf16.mxu0 0
        %529 = vmatpush1.bf16.msra.mxu0 %v446
        %530 = vmatprep.subr.bf16.mxu0 0
        %531 = vmatpush1.bf16.msra.mxu0 %v447
        %532 = vmatprep.subr.bf16.mxu0 0
        %533 = vmatpush1.bf16.msra.mxu0 %v448
        %534 = vmatprep.subr.bf16.mxu0 0
        %535 = vmatpush1.bf16.msra.mxu0 %v449
        %536 = vmatprep.subr.bf16.mxu0 0
        %537 = vmatpush1.bf16.msra.mxu0 %v450
        %538 = vmatprep.subr.bf16.mxu0 0
        %539 = vmatpush1.bf16.msra.mxu0 %v451
        %540 = vmatprep.subr.bf16.mxu0 0
        %541 = vmatpush1.bf16.msra.mxu0 %v452
        %542 = vmatprep.subr.bf16.mxu0 0
        %543 = vmatpush1.bf16.msra.mxu0 0
        %544 = vmatprep.subr.bf16.mxu0 0
        %545 = vmatpush1.bf16.msra.mxu0 0
        %546 = vmatprep.subr.bf16.mxu0 0
        %547 = vmatpush1.bf16.msra.mxu0 0
        %548 = vmatprep.subr.bf16.mxu0 0
        %549 = vmatpush1.bf16.msra.mxu0 0
        %550 = vmatprep.subr.bf16.mxu0 0
        %551 = vmatpush1.bf16.msra.mxu0 0
        %552 = vmatprep.subr.bf16.mxu0 0
        %553 = vmatpush1.bf16.msra.mxu0 0
        %554 = vmatprep.subr.bf16.mxu0 0
        %555 = vmatpush1.bf16.msra.mxu0 0
        %556 = vmatprep.subr.bf16.mxu0 0
        %557 = vmatpush1.bf16.msra.mxu0 0
        %558 = vmatprep.mubr.bf16.mxu0 0
        %559 = vmatmul.mubr.bf16.gmra.mrb[0].mxu0 %v389
        %v560 = vpop.f32.mrb[0].mxu0
        %v561 = vadd.f32 %v496, %v560
        %v562 = vpop.f32.mrb[0].mxu0
        %v563 = vpop.f32.mrb[0].mxu0
        %v564 = vadd.f32 %v499, %v563
        %v565 = vpop.f32.mrb[0].mxu0
        %566 = vmatprep.mubr.bf16.mxu0 0
        %567 = vmatmul.mubr.bf16.gmra.mrb[0].mxu0 %v390
        %v568 = vpop.f32.mrb[0].mxu0
        %v569 = vadd.f32 %v504, %v568
        %v570 = vpop.f32.mrb[0].mxu0
        %v571 = vpop.f32.mrb[0].mxu0
        %v572 = vadd.f32 %v507, %v571
        %v573 = vpop.f32.mrb[0].mxu0
        %574 = vmatprep.mubr.bf16.mxu0 0
        %575 = vmatmul.mubr.bf16.gmra.mrb[0].mxu0 %v391
        %v576 = vpop.f32.mrb[0].mxu0
        %v577 = vadd.f32 %v512, %v576
        %v578 = vpop.f32.mrb[0].mxu0
        %v579 = vpop.f32.mrb[0].mxu0
        %v580 = vadd.f32 %v515, %v579
        %v581 = vpop.f32.mrb[0].mxu0
        %582 = vmatprep.mubr.bf16.mxu0 0
        %583 = vmatmul.mubr.bf16.gmra.mrb[0].mxu0 %v392
        %v584 = vpop.f32.mrb[0].mxu0
        %v585 = vadd.f32 %v520, %v584
        %v586 = vpop.f32.mrb[0].mxu0
        %v587 = vpop.f32.mrb[0].mxu0
        %v588 = vadd.f32 %v523, %v587
        %v589 = vpop.f32.mrb[0].mxu0
        %590 = vdwg.mxu0
        %v591 = vsub.f32 %v335, %v561
        %v592 = vsub.f32 %v340, %v564
        %v593 = vsub.f32 %v345, %v569
        %v594 = vsub.f32 %v350, %v572
        %v595 = vsub.f32 %v355, %v577
        %v596 = vsub.f32 %v360, %v580
        %v597 = vsub.f32 %v365, %v585
        %v598 = vsub.f32 %v370, %v588
        %v599 = vmul.f32 %v591, %v591
        %v600 = vmul.f32 %v592, %v592
        %v601 = vmul.f32 %v593, %v593
        %v602 = vmul.f32 %v594, %v594
        %v603 = vmul.f32 %v595, %v595
        %v604 = vmul.f32 %v596, %v596
        %v605 = vmul.f32 %v597, %v597
        %v606 = vmul.f32 %v598, %v598
        %v607 = vpack.c.bf16 %v600, %v599
        %v608 = vpack.c.bf16 %v602, %v601
        %v609 = vpack.c.bf16 %v604, %v603
        %v610 = vpack.c.bf16 %v606, %v605
        %v611 = vunpack.c.l.bf16 %v607
        %v612 = vunpack.c.h.bf16 %v607
        %v613 = vunpack.c.l.bf16 %v608
        %v614 = vunpack.c.h.bf16 %v608
        %v615 = vunpack.c.l.bf16 %v609
        %v616 = vunpack.c.h.bf16 %v609
        %v617 = vunpack.c.l.bf16 %v610
        %v618 = vunpack.c.h.bf16 %v610
        %v619 = vsub.f32 %v599, %v611
        %v620 = vsub.f32 %v600, %v612
        %v621 = vsub.f32 %v601, %v613
        %v622 = vsub.f32 %v602, %v614
        %v623 = vsub.f32 %v603, %v615
        %v624 = vsub.f32 %v604, %v616
        %v625 = vsub.f32 %v605, %v617
        %v626 = vsub.f32 %v606, %v618
        %v627 = vpack.c.bf16 %v620, %v619
        %v628 = vpack.c.bf16 %v622, %v621
        %v629 = vpack.c.bf16 %v624, %v623
        %v630 = vpack.c.bf16 %v626, %v625
        %631 = vmatprep.subr.bf16.mxu0 0
        %632 = vmatpush1.bf16.msra.mxu0 %v445
        %633 = vmatprep.subr.bf16.mxu0 0
        %634 = vmatpush1.bf16.msra.mxu0 %v446
        %635 = vmatprep.subr.bf16.mxu0 0
        %636 = vmatpush1.bf16.msra.mxu0 %v447
        %637 = vmatprep.subr.bf16.mxu0 0
        %638 = vmatpush1.bf16.msra.mxu0 %v448
        %639 = vmatprep.subr.bf16.mxu0 0
        %640 = vmatpush1.bf16.msra.mxu0 %v449
        %641 = vmatprep.subr.bf16.mxu0 0
        %642 = vmatpush1.bf16.msra.mxu0 %v450
        %643 = vmatprep.subr.bf16.mxu0 0
        %644 = vmatpush1.bf16.msra.mxu0 %v451
        %645 = vmatprep.subr.bf16.mxu0 0
        %646 = vmatpush1.bf16.msra.mxu0 %v452
        %647 = vmatprep.subr.bf16.mxu0 0
        %648 = vmatpush1.bf16.msra.mxu0 0
        %649 = vmatprep.subr.bf16.mxu0 0
        %650 = vmatpush1.bf16.msra.mxu0 0
        %651 = vmatprep.subr.bf16.mxu0 0
        %652 = vmatpush1.bf16.msra.mxu0 0
        %653 = vmatprep.subr.bf16.mxu0 0
        %654 = vmatpush1.bf16.msra.mxu0 0
        %655 = vmatprep.subr.bf16.mxu0 0
        %656 = vmatpush1.bf16.msra.mxu0 0
        %657 = vmatprep.subr.bf16.mxu0 0
        %658 = vmatpush1.bf16.msra.mxu0 0
        %659 = vmatprep.subr.bf16.mxu0 0
        %660 = vmatpush1.bf16.msra.mxu0 0
        %661 = vmatprep.subr.bf16.mxu0 0
        %662 = vmatpush1.bf16.msra.mxu0 0
        %663 = vmatprep.mubr.bf16.mxu0 0
        %664 = vmatmul.mubr.bf16.gmra.mrb[0].mxu0 %v627
        %v665 = vpop.f32.mrb[0].mxu0
        %v666 = vadd.f32 0.0, %v665
        %v667 = vpop.f32.mrb[0].mxu0
        %v668 = vpop.f32.mrb[0].mxu0
        %v669 = vadd.f32 0.0, %v668
        %v670 = vpop.f32.mrb[0].mxu0
        %671 = vmatprep.mubr.bf16.mxu0 0
        %672 = vmatmul.mubr.bf16.gmra.mrb[0].mxu0 %v628
        %v673 = vpop.f32.mrb[0].mxu0
        %v674 = vadd.f32 0.0, %v673
        %v675 = vpop.f32.mrb[0].mxu0
        %v676 = vpop.f32.mrb[0].mxu0
        %v677 = vadd.f32 0.0, %v676
        %v678 = vpop.f32.mrb[0].mxu0
        %679 = vmatprep.mubr.bf16.mxu0 0
        %680 = vmatmul.mubr.bf16.gmra.mrb[0].mxu0 %v629
        %v681 = vpop.f32.mrb[0].mxu0
        %v682 = vadd.f32 0.0, %v681
        %v683 = vpop.f32.mrb[0].mxu0
        %v684 = vpop.f32.mrb[0].mxu0
        %v685 = vadd.f32 0.0, %v684
        %v686 = vpop.f32.mrb[0].mxu0
        %687 = vmatprep.mubr.bf16.mxu0 0
        %688 = vmatmul.mubr.bf16.gmra.mrb[0].mxu0 %v630
        %v689 = vpop.f32.mrb[0].mxu0
        %v690 = vadd.f32 0.0, %v689
        %v691 = vpop.f32.mrb[0].mxu0
        %v692 = vpop.f32.mrb[0].mxu0
        %v693 = vadd.f32 0.0, %v692
        %v694 = vpop.f32.mrb[0].mxu0
        %695 = vdwg.mxu0
        %696 = vmatprep.subr.bf16.mxu0 0
        %697 = vmatpush1.bf16.msra.mxu0 %v445
        %698 = vmatprep.subr.bf16.mxu0 0
        %699 = vmatpush1.bf16.msra.mxu0 %v446
        %700 = vmatprep.subr.bf16.mxu0 0
        %701 = vmatpush1.bf16.msra.mxu0 %v447
        %702 = vmatprep.subr.bf16.mxu0 0
        %703 = vmatpush1.bf16.msra.mxu0 %v448
        %704 = vmatprep.subr.bf16.mxu0 0
        %705 = vmatpush1.bf16.msra.mxu0 %v449
        %706 = vmatprep.subr.bf16.mxu0 0
        %707 = vmatpush1.bf16.msra.mxu0 %v450
        %708 = vmatprep.subr.bf16.mxu0 0
        %709 = vmatpush1.bf16.msra.mxu0 %v451
        %710 = vmatprep.subr.bf16.mxu0 0
        %711 = vmatpush1.bf16.msra.mxu0 %v452
        %712 = vmatprep.subr.bf16.mxu0 0
        %713 = vmatpush1.bf16.msra.mxu0 0
        %714 = vmatprep.subr.bf16.mxu0 0
        %715 = vmatpush1.bf16.msra.mxu0 0
        %716 = vmatprep.subr.bf16.mxu0 0
        %717 = vmatpush1.bf16.msra.mxu0 0
        %718 = vmatprep.subr.bf16.mxu0 0
        %719 = vmatpush1.bf16.msra.mxu0 0
        %720 = vmatprep.subr.bf16.mxu0 0
        %721 = vmatpush1.bf16.msra.mxu0 0
        %722 = vmatprep.subr.bf16.mxu0 0
        %723 = vmatpush1.bf16.msra.mxu0 0
        %724 = vmatprep.subr.bf16.mxu0 0
        %725 = vmatpush1.bf16.msra.mxu0 0
        %726 = vmatprep.subr.bf16.mxu0 0
        %727 = vmatpush1.bf16.msra.mxu0 0
        %728 = vmatprep.mubr.bf16.mxu0 0
        %729 = vmatmul.mubr.bf16.gmra.mrb[0].mxu0 %v607
        %v730 = vpop.f32.mrb[0].mxu0
        %v731 = vadd.f32 %v666, %v730
        %v732 = vpop.f32.mrb[0].mxu0
        %v733 = vpop.f32.mrb[0].mxu0
        %v734 = vadd.f32 %v669, %v733
        %v735 = vpop.f32.mrb[0].mxu0
        %736 = vmatprep.mubr.bf16.mxu0 0
        %737 = vmatmul.mubr.bf16.gmra.mrb[0].mxu0 %v608
        %v738 = vpop.f32.mrb[0].mxu0
        %v739 = vadd.f32 %v674, %v738
        %v740 = vpop.f32.mrb[0].mxu0
        %v741 = vpop.f32.mrb[0].mxu0
        %v742 = vadd.f32 %v677, %v741
        %v743 = vpop.f32.mrb[0].mxu0
        %744 = vmatprep.mubr.bf16.mxu0 0
        %745 = vmatmul.mubr.bf16.gmra.mrb[0].mxu0 %v609
        %v746 = vpop.f32.mrb[0].mxu0
        %v747 = vadd.f32 %v682, %v746
        %v748 = vpop.f32.mrb[0].mxu0
        %v749 = vpop.f32.mrb[0].mxu0
        %v750 = vadd.f32 %v685, %v749
        %v751 = vpop.f32.mrb[0].mxu0
        %752 = vmatprep.mubr.bf16.mxu0 0
        %753 = vmatmul.mubr.bf16.gmra.mrb[0].mxu0 %v610
        %v754 = vpop.f32.mrb[0].mxu0
        %v755 = vadd.f32 %v690, %v754
        %v756 = vpop.f32.mrb[0].mxu0
        %v757 = vpop.f32.mrb[0].mxu0
        %v758 = vadd.f32 %v693, %v757
        %v759 = vpop.f32.mrb[0].mxu0
        %760 = vdwg.mxu0
        %v761 = vadd.f32 %v731, 1e-05
        %v762 = vadd.f32 %v734, 1e-05
        %v763 = vadd.f32 %v739, 1e-05
        %v764 = vadd.f32 %v742, 1e-05
        %v765 = vadd.f32 %v747, 1e-05
        %v766 = vadd.f32 %v750, 1e-05
        %v767 = vadd.f32 %v755, 1e-05
        %v768 = vadd.f32 %v758, 1e-05
        %v769 = vrsqrt.pop %v761
        %v770 = vrsqrt.pop %v762
        %v771 = vrsqrt.pop %v763
        %v772 = vrsqrt.pop %v764
        %v773 = vrsqrt.pop %v765
        %v774 = vrsqrt.pop %v766
        %v775 = vrsqrt.pop %v767
        %v776 = vrsqrt.pop %v768
        %v777 = vmul.f32 %v591, %v769
        %v778 = vmul.f32 %v592, %v770
        %v779 = vmul.f32 %v593, %v771
        %v780 = vmul.f32 %v594, %v772
        %v781 = vmul.f32 %v595, %v773
        %v782 = vmul.f32 %v596, %v774
        %v783 = vmul.f32 %v597, %v775
        %v784 = vmul.f32 %v598, %v776
        %v785 = vld [vmem:[%s3] sm:$0x1]
        %v787 = vlaneseq
        %v788 = vshrl.u32 %v787, 7
        %v789 = vsub.s32 0, %v788
        %v790 = vrot.slane %v785, %v789
        %v792 = vmul.f32 %v777, %v790
        %v793 = vmul.f32 %v778, %v790
        %v794 = vmul.f32 %v779, %v790
        %v795 = vmul.f32 %v780, %v790
        %v796 = vmul.f32 %v781, %v790
        %v797 = vmul.f32 %v782, %v790
        %v798 = vmul.f32 %v783, %v790
        %v799 = vmul.f32 %v784, %v790
        %v800 = vld [vmem:[%s4] sm:$0x1]
        %v802 = vlaneseq
        %v803 = vshrl.u32 %v802, 7
        %v804 = vsub.s32 0, %v803
        %v805 = vrot.slane %v800, %v804
        %v807 = vadd.f32 %v792, %v805
        %v808 = vadd.f32 %v793, %v805
        %v809 = vadd.f32 %v794, %v805
        %v810 = vadd.f32 %v795, %v805
        %v811 = vadd.f32 %v796, %v805
        %v812 = vadd.f32 %v797, %v805
        %v813 = vadd.f32 %v798, %v805
        %v814 = vadd.f32 %v799, %v805
        %815 = vst.msk [vmem:[%s218] sm:$0xff] %vm243, %v807
        %816 = vst.msk [vmem:[%s218 + $0x10] sm:$0xff] %vm243, %v808
        %817 = vst.msk [vmem:[%s218 + $0x20] sm:$0xff] %vm243, %v809
        %818 = vst.msk [vmem:[%s218 + $0x30] sm:$0xff] %vm243, %v810
        %819 = vst.msk [vmem:[%s218 + $0x40] sm:$0xff] %vm243, %v811
        %820 = vst.msk [vmem:[%s218 + $0x50] sm:$0xff] %vm243, %v812
        %821 = vst.msk [vmem:[%s218 + $0x60] sm:$0xff] %vm243, %v813
        %822 = vst.msk [vmem:[%s218 + $0x70] sm:$0xff] %vm243, %v814
        %831 = vrot.lane.b32.xlu0 %v807, 64
        %v832 = vpop.permute.xlu0 %831
        %833 = vrot.lane.b32.xlu0 %v808, 64
        %v834 = vpop.permute.xlu0 %833
        %835 = vrot.lane.b32.xlu0 %v809, 64
        %v836 = vpop.permute.xlu0 %835
        %837 = vrot.lane.b32.xlu0 %v810, 64
        %v838 = vpop.permute.xlu0 %837
        %839 = vrot.lane.b32.xlu0 %v811, 64
        %v840 = vpop.permute.xlu0 %839
        %841 = vrot.lane.b32.xlu0 %v812, 64
        %v842 = vpop.permute.xlu0 %841
        %843 = vrot.lane.b32.xlu0 %v813, 64
        %v844 = vpop.permute.xlu0 %843
        %845 = vrot.lane.b32.xlu0 %v814, 64
        %v846 = vpop.permute.xlu0 %845
        %s855 = scalar_lea.vmem %s218, 8 [#allocation2]
        %856 = vst.msk [vmem:[%s855] sm:$0xff] %vm243, %v832
        %857 = vst.msk [vmem:[%s855 + $0x10] sm:$0xff] %vm243, %v834
        %858 = vst.msk [vmem:[%s855 + $0x20] sm:$0xff] %vm243, %v836
        %859 = vst.msk [vmem:[%s855 + $0x30] sm:$0xff] %vm243, %v838
        %860 = vst.msk [vmem:[%s855 + $0x40] sm:$0xff] %vm243, %v840
        %861 = vst.msk [vmem:[%s855 + $0x50] sm:$0xff] %vm243, %v842
        %862 = vst.msk [vmem:[%s855 + $0x60] sm:$0xff] %vm243, %v844
        %863 = vst.msk [vmem:[%s855 + $0x70] sm:$0xff] %vm243, %v846
        %s864 = sand.u32 %s137, 1
        %s865 = scalar_lea.sflag [#allocation3], %s864
        %s866 = sand.u32 %s137, 1
        %s867 = smul.addr %s866, 128
        %s868 = scalar_lea.vmem [#allocation2], %s867
        // Predicated region
        $region41: #{tpu_custom_call.1} parent=39 // pred_check
          %p869 = pneg %p147
        $region42: #{tpu_custom_call.1} parent=39 // pred_check_branch
          %871 = sbr.rel (%p869) target = $region44
        $region43: #{tpu_custom_call.1} parent=39 // pred_region
          %s872 = smul.u32 8, %s19
          %s874 = ssub.s32 2048, 2048
          %875 = vsyncadd %s865, %s874
          %s876 = smul.addr %s872, 2
          %s877 = smul.addr %s876, 128
          %s878 = scalar_lea.hbm %s5, %s877
          %s879 = sshll.u32 %s868, 4
          %s880 = int_to_ptr.vmem [resolvable:$true] %s879
          %885 = dma.vmem_to_hbm [thread:$0]  %s880, 2048, %s878, %s865, 128, 128, 8
        $region44: #{tpu_custom_call.1} parent=39 // pred_fallthru
          _
      $region40: #{tpu_custom_call.1} parent=5 // pred_fallthru
        _
      %p886 = scmp.le.s32.totalorder 2, %s14
      // Predicated region
      $region45: #{tpu_custom_call.1} parent=5 // pred_check
        %p887 = pneg %p886
      $region46: #{tpu_custom_call.1} parent=5 // pred_check_branch
        %889 = sbr.rel (%p887) target = $region48
      $region47: #{tpu_custom_call.1} parent=5 // pred_region
        %s890 = ssub.s32 %s14, 2
        // Predicated region
        $region49: #{tpu_custom_call.1} parent=47 // pred_check
          %p891 = pneg %p153
        $region50: #{tpu_custom_call.1} parent=47 // pred_check_branch
          %893 = sbr.rel (%p891) target = $region52
        $region51: #{tpu_custom_call.1} parent=47 // pred_region
          %s894 = sand.u32 %s138, 1
          %s895 = scalar_lea.sflag [#allocation3], %s894
          %s896 = sand.u32 %s138, 1
          %s897 = smul.addr %s896, 128
          %s898 = scalar_lea.vmem [#allocation2], %s897
          %899 = dma.done %s895, 2048
        $region52: #{tpu_custom_call.1} parent=47 // pred_fallthru
          _
      $region48: #{tpu_custom_call.1} parent=5 // pred_fallthru
        _
    $region6: #{tpu_custom_call.1} parent=1 // loop_footer
      %s18 = sadd.s32 1, %s14
    $region7: #{tpu_custom_call.1} parent=1 // loop_footer_branch
      %13 = sbr.rel target = $region3
    $region8: #{tpu_custom_call.1} parent=1 // loop_exit
      _
    %900 = vsyncpa [#allocation3], 1
    %s901 = scalar_lea.sflag [#allocation3], 1
    %902 = vsyncpa %s901, 1

</llo_original>
